<compile_context>
chip_gen: v6e
topology: v6e:2x2x1
jax: 0.10.0
libtpu: 0.0.40
codegen_flags: <defaults>
</compile_context>

<pallas_src>
import jax
import jax.numpy as jnp
from jax import lax
from jax.experimental import pallas as pl
from jax.experimental.pallas import tpu as pltpu


def _shuffle_kernel(perm_ref, x_ref, o_ref):
    # perm_ref : (s_tile, 1) int32  — source row index for each output row of this tile
    # x_ref    : (S, c_tile)        — full spatial extent, one channel tile, one batch
    # o_ref    : (s_tile, c_tile)
    s_tile = o_ref.shape[0]
    S = x_ref.shape[0]

    src = perm_ref[...]                                        # (s_tile, 1) int32
    col = lax.broadcasted_iota(jnp.int32, (s_tile, S), 1)      # [i, k] = k
    onehot = (col == src).astype(x_ref.dtype)                  # [i, k] = 1  iff  k == perm[i]

    # out[i, c] = sum_k onehot[i, k] * x[k, c] = x[perm[i], c]   (MXU, f32 accumulate)
    gathered = jnp.dot(onehot, x_ref[...], preferred_element_type=jnp.float32)
    o_ref[...] = gathered.astype(o_ref.dtype)


def _pick_tile(n, unit, cap):
    """Largest t <= cap with t % unit == 0 and n % t == 0; fall back to full n."""
    if n <= cap or n % unit != 0:
        return n
    best = unit
    t = unit
    while t <= cap:
        if n % t == 0:
            best = t
        t += unit
    return best


def shuffle(x, perm, *, training=True):
    """Pallas equivalent of Shuffle.forward.

    x    : (B, H, W, C) array (channels-last, as the PyTorch module expects)
    perm : (H*W,) integer permutation of the spatial positions
    """
    if not training:
        return x

    B, H, W, C = x.shape
    S = H * W
    x_flat = x.reshape(B, S, C)
    perm2d = perm.astype(jnp.int32).reshape(S, 1)

    # Tile sizes: full extents for small arrays; (8, 128)-aligned tiles for big
    # ones so double-buffered blocks stay inside v7x's 64 MiB VMEM.
    s_tile = _pick_tile(S, 8, 512)
    c_tile = _pick_tile(C, 128, 512)
    grid = (B, S // s_tile, C // c_tile)

    out = pl.pallas_call(
        _shuffle_kernel,
        out_shape=jax.ShapeDtypeStruct((B, S, C), x.dtype),
        grid=grid,
        in_specs=[
            # perm: constant across the grid -> DMA'd once, stays resident.
            pl.BlockSpec((s_tile, 1), lambda b, si, ci: (si, 0)),
            # x: full spatial extent (needed to gather), one batch, one C tile.
            pl.BlockSpec((None, S, c_tile), lambda b, si, ci: (b, 0, ci)),
        ],
        out_specs=pl.BlockSpec((None, s_tile, c_tile), lambda b, si, ci: (b, si, ci)),
        compiler_params=pltpu.CompilerParams(
            dimension_semantics=("parallel", "parallel", "parallel")),
    )(perm2d, x_flat)

    return out.reshape(B, H, W, C)


if __name__ == "__main__":
    key = jax.random.PRNGKey(0)
    kx, kp = jax.random.split(key)

    # Small, lane-dense example: S = 64 spatial positions, C = 128 channels.
    B, H, W, C = 2, 8, 8, 128
    x = jax.random.normal(kx, (B, H, W, C), dtype=jnp.float32)
    # Deterministic stand-in for torch.randperm(H * W).
    perm = jax.random.permutation(kp, H * W).astype(jnp.int32)

    y = jax.block_until_ready(shuffle(x, perm, training=True))

    # Pure-JAX reference of the exact PyTorch semantics.
    ref = x.reshape(B, H * W, C)[:, perm, :].reshape(B, H, W, C)
    assert y.shape == x.shape and y.dtype == x.dtype
    assert bool(jnp.allclose(y, ref))

    # Eval-mode path (identity).
    y_eval = jax.block_until_ready(shuffle(x, perm, training=False))
    assert bool(jnp.array_equal(y_eval, x))

    print("KERNEL_OK")
</pallas_src>

<mosaic_0001>
module attributes {stable_mosaic.version = 11 : i64} {
  func.func @_shuffle_kernel(%arg0: i32, %arg1: i32, %arg2: i32, %arg3: memref<64x1xi32, #tpu.memory_space<vmem>>, %arg4: memref<1x64x128xf32, #tpu.memory_space<vmem>>, %arg5: memref<1x64x128xf32, #tpu.memory_space<vmem>>) attributes {dimension_semantics = [#tpu.dimension_semantics<parallel>, #tpu.dimension_semantics<parallel>, #tpu.dimension_semantics<parallel>], iteration_bounds = array<i64: 2, 1, 1>, scalar_prefetch = 0 : i64, scratch_operands = 0 : i64, tpu.core_type = #tpu.core_type<tc>, window_params = [{transform_indices = @transform_0, window_bounds = array<i64: 64, 1>}, {transform_indices = @transform_1, window_bounds = array<i64: 1, 64, 128>}, {transform_indices = @transform_2, window_bounds = array<i64: 1, 64, 128>}]} {
    %c0 = arith.constant 0 : index
    %c0_0 = arith.constant 0 : index
    %0 = vector.load %arg3[%c0, %c0_0] : memref<64x1xi32, #tpu.memory_space<vmem>>, vector<64x1xi32>
    %1 = tpu.iota {dimensions = array<i32: 1>} : vector<64x64xi32>
    %2 = vector.broadcast %0 : vector<64x1xi32> to vector<64x64xi32>
    %3 = arith.cmpi eq, %1, %2 : vector<64x64xi32>
    %4 = arith.extui %3 : vector<64x64xi1> to vector<64x64xi32>
    %5 = arith.sitofp %4 : vector<64x64xi32> to vector<64x64xf32>
    %c0_1 = arith.constant 0 : index
    %c0_2 = arith.constant 0 : index
    %c0_3 = arith.constant 0 : index
    %6 = vector.load %arg4[%c0_1, %c0_2, %c0_3] : memref<1x64x128xf32, #tpu.memory_space<vmem>>, vector<1x64x128xf32>
    %7 = vector.shape_cast %6 : vector<1x64x128xf32> to vector<64x128xf32>
    %cst = arith.constant dense<0.000000e+00> : vector<64x128xf32>
    %8 = tpu.matmul %5, %7, %cst {dimension_numbers = #tpu.dot_dimension_numbers<[1], [0], [0], [1], [0, 0, 1, 1], [], []>} : vector<64x64xf32>, vector<64x128xf32>, vector<64x128xf32> -> vector<64x128xf32>
    %c0_4 = arith.constant 0 : index
    %c0_5 = arith.constant 0 : index
    %c0_6 = arith.constant 0 : index
    %9 = vector.load %arg5[%c0_4, %c0_5, %c0_6] : memref<1x64x128xf32, #tpu.memory_space<vmem>>, vector<1x64x128xf32>
    %10 = vector.shape_cast %9 : vector<1x64x128xf32> to vector<64x128xf32>
    %11 = vector.shape_cast %8 : vector<64x128xf32> to vector<1x64x128xf32>
    tpu.vector_store %arg5[%c0_4, %c0_5, %c0_6], %11 {strides = array<i32>} : memref<1x64x128xf32, #tpu.memory_space<vmem>>, vector<1x64x128xf32>,
    return
  }
  func.func @transform_0(%arg0: i32, %arg1: i32, %arg2: i32) -> (i32, i32) {
    %c0_i32 = arith.constant 0 : i32
    %c0_i32_0 = arith.constant 0 : i32
    return %arg1, %c0_i32 : i32, i32
  }
  func.func @transform_1(%arg0: i32, %arg1: i32, %arg2: i32) -> (i32, i32, i32) {
    %c0_i32 = arith.constant 0 : i32
    %c0_i32_0 = arith.constant 0 : i32
    return %arg0, %c0_i32, %arg2 : i32, i32, i32
  }
  func.func @transform_2(%arg0: i32, %arg1: i32, %arg2: i32) -> (i32, i32, i32) {
    %c0_i32 = arith.constant 0 : i32
    return %arg0, %arg1, %arg2 : i32, i32, i32
  }
}

</mosaic_0001>

<llo_original>
// kernel: tpu_custom_call.1
$region0: #{tpu_custom_call.1}
  #allocation0 [shape = 'u32[]', space=smem, size = 0x4, offset = 0x4, fixed_abs, tag = 'smem constant byte address 0x4 - core index']
  #allocation1 [shape = 'u32[144,128]{1,0:T(1,128)}', space=vmem, size = 0x12000, scoped, tag = 'internal scratch']
  %s0 = inlined_call_operand.vmem [shape: s32[64,1], index: 0, kind: input, shape index: {}]
  %s1 = inlined_call_operand.hbm [shape: f32[2,64,128], index: 1, kind: input, shape index: {}]
  %s2 = inlined_call_operand.hbm [shape: f32[2,64,128], index: 2, kind: output, shape index: {}]
  %s3 = sld [smem:[#allocation0]]
  $region45: #{tpu_custom_call.1} parent=0
    _
  %s5 = ssub.s32 1, %s3
  %s6 = scalar_select 0, %s5, %s3
  $region1: #{tpu_custom_call.1} parent=0
    #allocation2 [shape = 'u8[65536]{0}', space=vmem, size = 0x10000, scoped, tag = 'input window, operand 1']
    #allocation3 [shape = 's32[2]{0}', space=sflag, size = 0x8, scoped, tag = 'scoped memory for tpu_custom_call.1']
    #allocation4 [shape = 's32[2]{0}', space=sflag, size = 0x8, scoped, tag = 'scoped memory for tpu_custom_call.1']
    #allocation5 [shape = 'u8[65536]{0}', space=vmem, size = 0x10000, scoped, tag = 'output window, operand 0']
    %7 = vsyncpa [#allocation3], 0
    %s8 = scalar_lea.sflag [#allocation3], 1
    %9 = vsyncpa %s8, 0
    %10 = vsyncpa [#allocation4], 0
    %s11 = scalar_lea.sflag [#allocation4], 1
    %12 = vsyncpa %s11, 0
    loop: start=0, step=1, limit=4
    $region2: #{tpu_custom_call.1} parent=1 // loop_pre_header
      _
    $region3: #{tpu_custom_call.1} parent=1 // loop_header
      %s14 = sphi 0, %s18
      %p15 = scmp.ge.s32.totalorder %s14, 4
      %s21 = sphi 0, %s40
      %s22 = sphi 0, %s36
      %s23 = sphi 0, %s32
      %s24 = sphi 0, %s21
      %s25 = sphi 0, %s22
      %s26 = sphi 0, %s23
      %s27 = sphi 0, %s24
      %s28 = sphi 0, %s25
      %s29 = sphi 0, %s26
      %s43 = sphi 0, %s45
      %s46 = sphi 0, %s43
      %s47 = sphi 0, %s46
      %s63 = sphi 0, %s47
      %s71 = sphi 0, %s73
      %s74 = sphi 0, %s71
      %s75 = sphi 0, %s74
      %s91 = sphi 0, %s75
      %s101 = sphi 0, %s103
      %s104 = sphi 0, %s101
      %s105 = sphi 0, %s104
      %s121 = sphi 0, %s105
    $region4: #{tpu_custom_call.1} parent=1 // loop_header_branch
      %17 = sbr.rel (%p15) target = $region8
    $region5: #{tpu_custom_call.1} parent=1 // loop_body
      %s19 = ssub.s32 %s14, 1
      %s20 = ssub.s32 %s14, 2
      %s30 = sadd.s32 1, %s23
      %p31 = scmp.ge.s32.totalorder %s30, 1
      %s32 = scalar_select %p31, 0, %s30
      %s33 = sadd.s32 1, %s22
      %s34 = scalar_select %p31, %s33, %s22
      %p35 = scmp.ge.s32.totalorder %s34, 1
      %s36 = scalar_select %p35, 0, %s34
      %s37 = sadd.s32 1, %s21
      %s38 = scalar_select %p35, %s37, %s21
      %p39 = scmp.ge.s32.totalorder %s38, 2
      %s40 = scalar_select %p39, 0, %s38
      %s41 = ssub.s32 %s22, %s36
      %p42 = scmp.eq.s32.totalorder %s41, 0
      %s44 = sadd.s32 %s43, 1
      %s45 = scalar_select %p42, %s43, %s44
      %p48 = pneg %p42
      %p49 = scmp.eq.s32.totalorder %s14, 1
      %p50 = por %p48, %p49
      %p51 = scmp.ne.s32.totalorder %s43, %s46
      %p52 = scmp.eq.s32.totalorder %s14, 0
      %p53 = por %p51, %p52
      %p54 = scmp.ne.s32.totalorder %s43, %s46
      %p55 = scmp.eq.s32.totalorder %s19, 1
      %p56 = por %p54, %p55
      %p57 = scmp.ne.s32.totalorder %s46, %s47
      %p58 = scmp.eq.s32.totalorder %s19, 0
      %p59 = por %p57, %p58
      %p60 = scmp.ne.s32.totalorder %s46, %s47
      %p61 = scmp.eq.s32.totalorder %s20, 1
      %p62 = por %p60, %p61
      %p64 = scmp.ne.s32.totalorder %s47, %s63
      %p65 = scmp.eq.s32.totalorder %s20, 0
      %p66 = por %p64, %p65
      %s67 = ssub.s32 %s21, %s40
      %s68 = ssub.s32 %s23, %s32
      %s69 = sor.u32 %s67, %s68
      %p70 = scmp.eq.s32.totalorder %s69, 0
      %s72 = sadd.s32 %s71, 1
      %s73 = scalar_select %p70, %s71, %s72
      %p76 = pneg %p70
      %p77 = scmp.eq.s32.totalorder %s14, 1
      %p78 = por %p76, %p77
      %p79 = scmp.ne.s32.totalorder %s71, %s74
      %p80 = scmp.eq.s32.totalorder %s14, 0
      %p81 = por %p79, %p80
      %p82 = scmp.ne.s32.totalorder %s71, %s74
      %p83 = scmp.eq.s32.totalorder %s19, 1
      %p84 = por %p82, %p83
      %p85 = scmp.ne.s32.totalorder %s74, %s75
      %p86 = scmp.eq.s32.totalorder %s19, 0
      %p87 = por %p85, %p86
      %p88 = scmp.ne.s32.totalorder %s74, %s75
      %p89 = scmp.eq.s32.totalorder %s20, 1
      %p90 = por %p88, %p89
      %p92 = scmp.ne.s32.totalorder %s75, %s91
      %p93 = scmp.eq.s32.totalorder %s20, 0
      %p94 = por %p92, %p93
      %s95 = ssub.s32 %s21, %s40
      %s96 = ssub.s32 %s22, %s36
      %s97 = sor.u32 %s95, %s96
      %s98 = ssub.s32 %s23, %s32
      %s99 = sor.u32 %s97, %s98
      %p100 = scmp.eq.s32.totalorder %s99, 0
      %s102 = sadd.s32 %s101, 1
      %s103 = scalar_select %p100, %s101, %s102
      %p106 = pneg %p100
      %p107 = scmp.eq.s32.totalorder %s14, 1
      %p108 = por %p106, %p107
      %p109 = scmp.ne.s32.totalorder %s101, %s104
      %p110 = scmp.eq.s32.totalorder %s14, 0
      %p111 = por %p109, %p110
      %p112 = scmp.ne.s32.totalorder %s101, %s104
      %p113 = scmp.eq.s32.totalorder %s19, 1
      %p114 = por %p112, %p113
      %p115 = scmp.ne.s32.totalorder %s104, %s105
      %p116 = scmp.eq.s32.totalorder %s19, 0
      %p117 = por %p115, %p116
      %p118 = scmp.ne.s32.totalorder %s104, %s105
      %p119 = scmp.eq.s32.totalorder %s20, 1
      %p120 = por %p118, %p119
      %p122 = scmp.ne.s32.totalorder %s105, %s121
      %p123 = scmp.eq.s32.totalorder %s20, 0
      %p124 = por %p122, %p123
      %p125 = scmp.le.s32.totalorder 1, %s14
      %p126 = scmp.lt.s32.totalorder %s14, 3
      %p127 = pnand %p125, %p126
      %p128 = pneg %p127
      // Predicated region
      $region9: #{tpu_custom_call.1} parent=5 // pred_check
        _
      $region10: #{tpu_custom_call.1} parent=5 // pred_check_branch
        %130 = sbr.rel (%p127) target = $region12
      $region11: #{tpu_custom_call.1} parent=5 // pred_region
        %s131 = ssub.s32 %s14, 1
        // Predicated region
        $region13: #{tpu_custom_call.1} parent=11 // pred_check
          %p132 = pneg %p59
        $region14: #{tpu_custom_call.1} parent=11 // pred_check_branch
          %134 = sbr.rel (%p132) target = $region16
        $region15: #{tpu_custom_call.1} parent=11 // pred_region
          %s135 = smul.u32 8, %s25
          %p136 = scmp.lt.s32.totalorder %s135, 7
          %s137 = scalar_select %p136, %s135, 7
          %s138 = smul.addr %s137, 8
          %s139 = scalar_lea.vmem %s0, %s138
          %s140 = smul.u32 8, %s25
        $region16: #{tpu_custom_call.1} parent=11 // pred_fallthru
          _
      $region12: #{tpu_custom_call.1} parent=5 // pred_fallthru
        _
      %p141 = scmp.lt.s32.totalorder %s14, 2
      // Predicated region
      $region17: #{tpu_custom_call.1} parent=5 // pred_check
        %p142 = pneg %p141
      $region18: #{tpu_custom_call.1} parent=5 // pred_check_branch
        %144 = sbr.rel (%p142) target = $region20
      $region19: #{tpu_custom_call.1} parent=5 // pred_region
        // Predicated region
        $region21: #{tpu_custom_call.1} parent=19 // pred_check
          %p145 = pneg %p81
        $region22: #{tpu_custom_call.1} parent=19 // pred_check_branch
          %147 = sbr.rel (%p145) target = $region24
        $region23: #{tpu_custom_call.1} parent=19 // pred_region
          %s148 = sand.u32 %s71, 1
          %s149 = scalar_lea.sflag [#allocation3], %s148
          %s150 = sand.u32 %s71, 1
          %s151 = smul.addr %s150, 64
          %s152 = scalar_lea.vmem [#allocation2], %s151
          %s154 = ssub.s32 1024, 1024
          %155 = vsyncadd %s149, %s154
          %s156 = smul.addr %s21, 8
          %s157 = sadd.s32 %s23, %s156
          %s158 = smul.addr %s157, 128
          %s159 = scalar_lea.hbm %s1, %s158
          %s160 = sshll.u32 %s152, 4
          %s161 = int_to_ptr.vmem [resolvable:$true] %s160
          %166 = dma.hbm_to_vmem [thread:$0]  %s159, 1024, %s161, %s149, 128, 128, 8
        $region24: #{tpu_custom_call.1} parent=19 // pred_fallthru
          _
      $region20: #{tpu_custom_call.1} parent=5 // pred_fallthru
        _
      %p167 = scmp.le.s32.totalorder 1, %s14
      %p168 = scmp.lt.s32.totalorder %s14, 3
      %p169 = pnand %p167, %p168
      %p170 = pneg %p169
      // Predicated region
      $region25: #{tpu_custom_call.1} parent=5 // pred_check
        _
      $region26: #{tpu_custom_call.1} parent=5 // pred_check_branch
        %172 = sbr.rel (%p169) target = $region28
      $region27: #{tpu_custom_call.1} parent=5 // pred_region
        %s173 = ssub.s32 %s14, 1
        %s174 = sand.u32 %s74, 1
        %s175 = scalar_lea.sflag [#allocation3], %s174
        %s176 = sand.u32 %s74, 1
        %s177 = smul.addr %s176, 64
        %s178 = scalar_lea.vmem [#allocation2], %s177
        // Predicated region
        $region29: #{tpu_custom_call.1} parent=27 // pred_check
          %p179 = pneg %p87
        $region30: #{tpu_custom_call.1} parent=27 // pred_check_branch
          %181 = sbr.rel (%p179) target = $region32
        $region31: #{tpu_custom_call.1} parent=27 // pred_region
          %182 = dma.done %s175, 1024
        $region32: #{tpu_custom_call.1} parent=27 // pred_fallthru
          _
        %s183 = smul.u32 8, %s25
        %p184 = scmp.lt.s32.totalorder %s183, 7
        %s185 = scalar_select %p184, %s183, 7
        %s186 = smul.addr %s185, 8
        %s187 = scalar_lea.vmem %s0, %s186
        %p188 = pneg %p59
        %p189 = pneg %p56
        %s190 = sand.u32 %s74, 1
        %s191 = scalar_lea.sflag [#allocation3], %s190
        %s192 = sand.u32 %s74, 1
        %s193 = smul.addr %s192, 64
        %s194 = scalar_lea.vmem [#allocation2], %s193
        %p195 = pneg %p87
        %p196 = pneg %p84
        %p197 = pneg %p117
        %p198 = pneg %p114
        %s199 = sand.u32 %s104, 1
        %s200 = scalar_lea.sflag [#allocation4], %s199
        %s201 = sand.u32 %s104, 1
        %s202 = smul.addr %s201, 64
        %s203 = scalar_lea.vmem [#allocation5], %s202
        %s204 = smul.u32 8, %s25
        %p205 = scmp.lt.s32.totalorder %s204, 7
        %s206 = scalar_select %p205, %s204, 7
        %s207 = smul.addr %s206, 8
        %s208 = scalar_lea.vmem %s0, %s207
        %s209 = smul.u32 8, %s25
        %s210 = smul.u32 8, %s25
        %v211 = vld [vmem:[%s208] sm:$0xff]
        %v212 = vld [vmem:[%s208 + $0x8] sm:$0xff]
        %v213 = vld [vmem:[%s208 + $0x10] sm:$0xff]
        %v214 = vld [vmem:[%s208 + $0x18] sm:$0xff]
        %v215 = vld [vmem:[%s208 + $0x20] sm:$0xff]
        %v216 = vld [vmem:[%s208 + $0x28] sm:$0xff]
        %v217 = vld [vmem:[%s208 + $0x30] sm:$0xff]
        %v218 = vld [vmem:[%s208 + $0x38] sm:$0xff]
        %v219 = vlaneseq
        %v220 = vand.u32 %v219, 127
        %221 = vset.pattern.permute.xlu0 0
        %222 = vperm.xlu0 %221, %v211
        %v223 = vpop.permute.xlu0 %222
        %224 = vset.pattern.permute.xlu0 0
        %225 = vperm.xlu0 %224, %v212
        %v226 = vpop.permute.xlu0 %225
        %227 = vset.pattern.permute.xlu0 0
        %228 = vperm.xlu0 %227, %v213
        %v229 = vpop.permute.xlu0 %228
        %230 = vset.pattern.permute.xlu0 0
        %231 = vperm.xlu0 %230, %v214
        %v232 = vpop.permute.xlu0 %231
        %233 = vset.pattern.permute.xlu0 0
        %234 = vperm.xlu0 %233, %v215
        %v235 = vpop.permute.xlu0 %234
        %236 = vset.pattern.permute.xlu0 0
        %237 = vperm.xlu0 %236, %v216
        %v238 = vpop.permute.xlu0 %237
        %239 = vset.pattern.permute.xlu0 0
        %240 = vperm.xlu0 %239, %v217
        %v241 = vpop.permute.xlu0 %240
        %242 = vset.pattern.permute.xlu0 0
        %243 = vperm.xlu0 %242, %v218
        %v244 = vpop.permute.xlu0 %243
        %vm245 = vcmp.eq.s32.totalorder %v220, %v223
        %vm246 = vcmp.eq.s32.totalorder %v220, %v226
        %vm247 = vcmp.eq.s32.totalorder %v220, %v229
        %vm248 = vcmp.eq.s32.totalorder %v220, %v232
        %vm249 = vcmp.eq.s32.totalorder %v220, %v235
        %vm250 = vcmp.eq.s32.totalorder %v220, %v238
        %vm251 = vcmp.eq.s32.totalorder %v220, %v241
        %vm252 = vcmp.eq.s32.totalorder %v220, %v244
        %v253 = vsel %vm245, 1, 0
        %v254 = vsel %vm246, 1, 0
        %v255 = vsel %vm247, 1, 0
        %v256 = vsel %vm248, 1, 0
        %v257 = vsel %vm249, 1, 0
        %v258 = vsel %vm250, 1, 0
        %v259 = vsel %vm251, 1, 0
        %v260 = vsel %vm252, 1, 0
        %v261 = vcvt.s32.f32 %v253
        %v262 = vcvt.s32.f32 %v254
        %v263 = vcvt.s32.f32 %v255
        %v264 = vcvt.s32.f32 %v256
        %v265 = vcvt.s32.f32 %v257
        %v266 = vcvt.s32.f32 %v258
        %v267 = vcvt.s32.f32 %v259
        %v268 = vcvt.s32.f32 %v260
        %v269 = vld [vmem:[%s178] sm:$0xff]
        %v270 = vld [vmem:[%s178 + $0x8] sm:$0xff]
        %v271 = vld [vmem:[%s178 + $0x10] sm:$0xff]
        %v272 = vld [vmem:[%s178 + $0x18] sm:$0xff]
        %v273 = vld [vmem:[%s178 + $0x20] sm:$0xff]
        %v274 = vld [vmem:[%s178 + $0x28] sm:$0xff]
        %v275 = vld [vmem:[%s178 + $0x30] sm:$0xff]
        %v276 = vld [vmem:[%s178 + $0x38] sm:$0xff]
        %vm277 = vcmask 523264
        %v279 = vsel %vm277, %v261, 0
        %v282 = vsel %vm277, %v262, 0
        %v285 = vsel %vm277, %v263, 0
        %v288 = vsel %vm277, %v264, 0
        %v291 = vsel %vm277, %v265, 0
        %v294 = vsel %vm277, %v266, 0
        %v297 = vsel %vm277, %v267, 0
        %v300 = vsel %vm277, %v268, 0
        %302 = vmatprep.subr.mxu0 0.0
        %303 = vmatpush1.msra.mxu0 0.0
        %304 = vmatprep.subr.mxu0 0.0
        %305 = vmatpush1.msra.mxu0 0.0
        %306 = vmatprep.subr.mxu0 0.0
        %307 = vmatpush1.msra.mxu0 0.0
        %308 = vmatprep.subr.mxu0 0.0
        %309 = vmatpush1.msra.mxu0 0.0
        %310 = vmatprep.subr.mxu0 0.0
        %311 = vmatpush1.msra.mxu0 0.0
        %312 = vmatprep.subr.mxu0 0.0
        %313 = vmatpush1.msra.mxu0 0.0
        %314 = vmatprep.subr.mxu0 0.0
        %315 = vmatpush1.msra.mxu0 0.0
        %316 = vmatprep.subr.mxu0 0.0
        %317 = vmatpush1.msra.mxu0 0.0
        %318 = vmatprep.subr.mxu0 0.0
        %319 = vmatpush1.msra.mxu0 %v276
        %320 = vmatprep.subr.mxu0 0.0
        %321 = vmatpush1.msra.mxu0 %v275
        %322 = vmatprep.subr.mxu0 0.0
        %323 = vmatpush1.msra.mxu0 %v274
        %324 = vmatprep.subr.mxu0 0.0
        %325 = vmatpush1.msra.mxu0 %v273
        %326 = vmatprep.subr.mxu0 0.0
        %327 = vmatpush1.msra.mxu0 %v272
        %328 = vmatprep.subr.mxu0 0.0
        %329 = vmatpush1.msra.mxu0 %v271
        %330 = vmatprep.subr.mxu0 0.0
        %331 = vmatpush1.msra.mxu0 %v270
        %332 = vmatprep.subr.mxu0 0.0
        %333 = vmatpush1.msra.mxu0 %v269
        %334 = vmatprep.subr.mxu0 0.0
        %335 = vmatpush2.msra.mxu0 0.0
        %336 = vmatprep.subr.mxu0 0.0
        %337 = vmatpush2.msra.mxu0 0.0
        %338 = vmatprep.subr.mxu0 0.0
        %339 = vmatpush2.msra.mxu0 0.0
        %340 = vmatprep.subr.mxu0 0.0
        %341 = vmatpush2.msra.mxu0 0.0
        %342 = vmatprep.subr.mxu0 0.0
        %343 = vmatpush2.msra.mxu0 0.0
        %344 = vmatprep.subr.mxu0 0.0
        %345 = vmatpush2.msra.mxu0 0.0
        %346 = vmatprep.subr.mxu0 0.0
        %347 = vmatpush2.msra.mxu0 0.0
        %348 = vmatprep.subr.mxu0 0.0
        %349 = vmatpush2.msra.mxu0 0.0
        %350 = vmatprep.subr.mxu0 0.0
        %351 = vmatpush2.msra.mxu0 0.0
        %352 = vmatprep.subr.mxu0 0.0
        %353 = vmatpush2.msra.mxu0 0.0
        %354 = vmatprep.subr.mxu0 0.0
        %355 = vmatpush2.msra.mxu0 0.0
        %356 = vmatprep.subr.mxu0 0.0
        %357 = vmatpush2.msra.mxu0 0.0
        %358 = vmatprep.subr.mxu0 0.0
        %359 = vmatpush2.msra.mxu0 0.0
        %360 = vmatprep.subr.mxu0 0.0
        %361 = vmatpush2.msra.mxu0 0.0
        %362 = vmatprep.subr.mxu0 0.0
        %363 = vmatpush2.msra.mxu0 0.0
        %364 = vmatprep.subr.mxu0 0.0
        %365 = vmatpush2.msra.mxu0 0.0
        %366 = vmatprep.mubr.f32.mxu0 0.0
        %367 = vmatmul.mubr.f32.gmra.mxu0 %v279
        %v368 = vpop.f32.mrf.mxu0
        %v369 = vadd.f32 0.0, %v368
        %v370 = vpop.f32.mrf.mxu0
        %371 = vmatprep.mubr.f32.mxu0 0.0
        %372 = vmatmul.mubr.f32.gmra.mxu0 %v282
        %v373 = vpop.f32.mrf.mxu0
        %v374 = vadd.f32 0.0, %v373
        %v375 = vpop.f32.mrf.mxu0
        %376 = vmatprep.mubr.f32.mxu0 0.0
        %377 = vmatmul.mubr.f32.gmra.mxu0 %v285
        %v378 = vpop.f32.mrf.mxu0
        %v379 = vadd.f32 0.0, %v378
        %v380 = vpop.f32.mrf.mxu0
        %381 = vmatprep.mubr.f32.mxu0 0.0
        %382 = vmatmul.mubr.f32.gmra.mxu0 %v288
        %v383 = vpop.f32.mrf.mxu0
        %v384 = vadd.f32 0.0, %v383
        %v385 = vpop.f32.mrf.mxu0
        %386 = vmatprep.mubr.f32.mxu0 0.0
        %387 = vmatmul.mubr.f32.gmra.mxu0 %v291
        %v388 = vpop.f32.mrf.mxu0
        %v389 = vadd.f32 0.0, %v388
        %v390 = vpop.f32.mrf.mxu0
        %391 = vmatprep.mubr.f32.mxu0 0.0
        %392 = vmatmul.mubr.f32.gmra.mxu0 %v294
        %v393 = vpop.f32.mrf.mxu0
        %v394 = vadd.f32 0.0, %v393
        %v395 = vpop.f32.mrf.mxu0
        %396 = vmatprep.mubr.f32.mxu0 0.0
        %397 = vmatmul.mubr.f32.gmra.mxu0 %v297
        %v398 = vpop.f32.mrf.mxu0
        %v399 = vadd.f32 0.0, %v398
        %v400 = vpop.f32.mrf.mxu0
        %401 = vmatprep.mubr.f32.mxu0 0.0
        %402 = vmatmul.mubr.f32.gmra.mxu0 %v300
        %v403 = vpop.f32.mrf.mxu0
        %v404 = vadd.f32 0.0, %v403
        %v405 = vpop.f32.mrf.mxu0
        %406 = vdwg.mxu0
        %407 = vst [vmem:[%s203] sm:$0xff] %v369
        %408 = vst [vmem:[%s203 + $0x8] sm:$0xff] %v374
        %409 = vst [vmem:[%s203 + $0x10] sm:$0xff] %v379
        %410 = vst [vmem:[%s203 + $0x18] sm:$0xff] %v384
        %411 = vst [vmem:[%s203 + $0x20] sm:$0xff] %v389
        %412 = vst [vmem:[%s203 + $0x28] sm:$0xff] %v394
        %413 = vst [vmem:[%s203 + $0x30] sm:$0xff] %v399
        %414 = vst [vmem:[%s203 + $0x38] sm:$0xff] %v404
        %s415 = sand.u32 %s104, 1
        %s416 = scalar_lea.sflag [#allocation4], %s415
        %s417 = sand.u32 %s104, 1
        %s418 = smul.addr %s417, 64
        %s419 = scalar_lea.vmem [#allocation5], %s418
        // Predicated region
        $region33: #{tpu_custom_call.1} parent=27 // pred_check
          %p420 = pneg %p114
        $region34: #{tpu_custom_call.1} parent=27 // pred_check_branch
          %422 = sbr.rel (%p420) target = $region36
        $region35: #{tpu_custom_call.1} parent=27 // pred_region
          %s423 = smul.u32 8, %s25
          %s425 = ssub.s32 1024, 1024
          %426 = vsyncadd %s416, %s425
          %s427 = sadd.s32 %s26, %s423
          %s428 = smul.addr %s24, 8
          %s429 = sadd.s32 %s427, %s428
          %s430 = smul.addr %s429, 128
          %s431 = scalar_lea.hbm %s2, %s430
          %s432 = sshll.u32 %s419, 4
          %s433 = int_to_ptr.vmem [resolvable:$true] %s432
          %438 = dma.vmem_to_hbm [thread:$0]  %s433, 1024, %s431, %s416, 128, 128, 8
        $region36: #{tpu_custom_call.1} parent=27 // pred_fallthru
          _
      $region28: #{tpu_custom_call.1} parent=5 // pred_fallthru
        _
      %p439 = scmp.le.s32.totalorder 2, %s14
      // Predicated region
      $region37: #{tpu_custom_call.1} parent=5 // pred_check
        %p440 = pneg %p439
      $region38: #{tpu_custom_call.1} parent=5 // pred_check_branch
        %442 = sbr.rel (%p440) target = $region40
      $region39: #{tpu_custom_call.1} parent=5 // pred_region
        %s443 = ssub.s32 %s14, 2
        // Predicated region
        $region41: #{tpu_custom_call.1} parent=39 // pred_check
          %p444 = pneg %p120
        $region42: #{tpu_custom_call.1} parent=39 // pred_check_branch
          %446 = sbr.rel (%p444) target = $region44
        $region43: #{tpu_custom_call.1} parent=39 // pred_region
          %s447 = sand.u32 %s105, 1
          %s448 = scalar_lea.sflag [#allocation4], %s447
          %s449 = sand.u32 %s105, 1
          %s450 = smul.addr %s449, 64
          %s451 = scalar_lea.vmem [#allocation5], %s450
          %452 = dma.done %s448, 1024
        $region44: #{tpu_custom_call.1} parent=39 // pred_fallthru
          _
      $region40: #{tpu_custom_call.1} parent=5 // pred_fallthru
        _
    $region6: #{tpu_custom_call.1} parent=1 // loop_footer
      %s18 = sadd.s32 1, %s14
    $region7: #{tpu_custom_call.1} parent=1 // loop_footer_branch
      %13 = sbr.rel target = $region3
    $region8: #{tpu_custom_call.1} parent=1 // loop_exit
      _
    %453 = vsyncpa [#allocation3], 1
    %s454 = scalar_lea.sflag [#allocation3], 1
    %455 = vsyncpa %s454, 1
    %456 = vsyncpa [#allocation4], 1
    %s457 = scalar_lea.sflag [#allocation4], 1
    %458 = vsyncpa %s457, 1

</llo_original>
